<compile_context>
chip_gen: v7x
topology: tpu7x:2x2x1
jax: 0.10.0
libtpu: 0.0.40
codegen_flags: <defaults>
</compile_context>

<pallas_src>
import jax
import jax.numpy as jnp
from jax import lax
from jax.experimental import pallas as pl
from jax.experimental.pallas import tpu as pltpu

LANES = 128      # hidden dim padded to a multiple of the TPU lane width
SUBLANES = 8     # batch dim padded to a multiple of the sublane count


# ---------------------------------------------------------------------------
# Pallas kernel: one invocation, whole (batched) recurrence inside a fori_loop.
# ---------------------------------------------------------------------------
def rnn_kernel(x_ref,      # VMEM (S*Bp, Hp) f32 -- embedded inputs, time-major
               wih_ref,    # VMEM (Hp, Hp)   f32 -- W_ih^T (zero-padded)
               whh_ref,    # VMEM (Hp, Hp)   f32 -- W_hh^T (zero-padded)
               b_ref,      # VMEM (1, Hp)    f32 -- b_ih + b_hh (zero-padded)
               out_ref,    # VMEM (Bp, Hp)   f32 -- final hidden states
               p_ref):     # VMEM (S*Bp, Hp) f32 -- scratch: hoisted projection
    Bp, Hp = out_ref.shape
    S = x_ref.shape[0] // Bp

    # Hoisted (non-recurrent) input projection: single big MXU matmul.
    #   P[t*Bp + b, :] = x[t, b, :] @ W_ih^T + (b_ih + b_hh)
    p_ref[...] = (
        jnp.dot(x_ref[...], wih_ref[...], preferred_element_type=jnp.float32)
        + b_ref[...]
    )

    # Serial recurrence over time; only h @ W_hh^T remains on the critical path.
    # NOTE: an explicit matmul_push_rhs/acc/pop drive of the MXU (keeping W_hh
    # resident in weight registers) could shave further per-step latency, but
    # batching the LHS already amortizes the push; keep the portable jnp.dot.
    def step(t, h):
        base = pl.multiple_of(t * Bp, Bp)             # aligned sublane offset
        p_blk = p_ref[pl.ds(base, Bp), :]             # (Bp, Hp), static stride
        return jnp.tanh(
            p_blk + jnp.dot(h, whh_ref[...], preferred_element_type=jnp.float32)
        )

    h0 = jnp.zeros((Bp, Hp), jnp.float32)
    unroll = True if S <= 16 else 8                   # guard instruction blowup
    out_ref[...] = lax.fori_loop(0, S, step, h0, unroll=unroll)


# ---------------------------------------------------------------------------
# Wrapper: gather embeddings, pad/transpose params, single pallas_call.
# ---------------------------------------------------------------------------
@jax.jit
def rnn_forward_pallas(token_ids, emb, w_ih, w_hh, b_ih, b_hh):
    """Final hidden state(s).

    token_ids: (S,) int32 for one tree, or (B, S) for a batch of trees.
    Returns (H,) or (B, H) accordingly (matches h[-1] of the PyTorch module).
    """
    single = token_ids.ndim == 1
    ids = token_ids[None, :] if single else token_ids
    B, S = ids.shape
    V, H = emb.shape
    Hp = ((H + LANES - 1) // LANES) * LANES
    Bp = ((B + SUBLANES - 1) // SUBLANES) * SUBLANES

    f32 = jnp.float32
    # Untrusted ids: clamp so the wrapper-side gather never reads OOB.
    ids = jnp.clip(ids.astype(jnp.int32), 0, V - 1)

    # Embedding gather on the host/XLA side (removes vocab-sized VMEM usage).
    x_seq = jnp.take(emb.astype(f32), ids, axis=0)          # (B, S, H)
    x_tm = jnp.transpose(x_seq, (1, 0, 2))                   # (S, B, H) time-major
    x_p = (
        jnp.zeros((S, Bp, Hp), f32).at[:, :B, :H].set(x_tm)
        .reshape(S * Bp, Hp)
    )

    # Padded weights/bias: padded lanes/rows are exactly zero (see invariant).
    wih_p = jnp.zeros((Hp, Hp), f32).at[:H, :H].set(jnp.asarray(w_ih, f32).T)
    whh_p = jnp.zeros((Hp, Hp), f32).at[:H, :H].set(jnp.asarray(w_hh, f32).T)
    b_p = jnp.zeros((1, Hp), f32).at[0, :H].set((b_ih + b_hh).astype(f32))

    # Advisory cost estimate: projection + recurrence matmuls, tanh per step.
    flops = 2 * (S * Bp) * Hp * Hp + 2 * S * Bp * Hp * Hp
    transcendentals = S * Bp * Hp
    bytes_accessed = 4 * (S * Bp * Hp + 2 * Hp * Hp + Hp + Bp * Hp)
    cost = pl.CostEstimate(
        flops=flops, transcendentals=transcendentals, bytes_accessed=bytes_accessed
    )

    out = pl.pallas_call(
        rnn_kernel,
        out_shape=jax.ShapeDtypeStruct((Bp, Hp), f32),
        in_specs=[pl.BlockSpec(memory_space=pltpu.MemorySpace.VMEM)] * 4,
        out_specs=pl.BlockSpec(memory_space=pltpu.MemorySpace.VMEM),
        scratch_shapes=[pltpu.VMEM((S * Bp, Hp), f32)],
        cost_estimate=cost,
    )(x_p, wih_p, whh_p, b_p)

    h = out[:B, :H]
    return h[0] if single else h


# ---------------------------------------------------------------------------
# Pure-JAX reference (matches torch nn.Embedding + nn.RNN(tanh) forward).
# ---------------------------------------------------------------------------
def rnn_forward_ref_single(token_ids, emb, w_ih, w_hh, b_ih, b_hh):
    x_seq = jnp.take(emb, token_ids, axis=0)                 # (S, H)

    def step(h, x):
        h_new = jnp.tanh(x @ w_ih.T + b_ih + h @ w_hh.T + b_hh)
        return h_new, None

    h0 = jnp.zeros((emb.shape[1],), jnp.float32)
    h_last, _ = lax.scan(step, h0, x_seq)
    return h_last


def rnn_forward_ref(token_ids, emb, w_ih, w_hh, b_ih, b_hh):
    if token_ids.ndim == 1:
        return rnn_forward_ref_single(token_ids, emb, w_ih, w_hh, b_ih, b_hh)
    return jax.vmap(
        lambda ids: rnn_forward_ref_single(ids, emb, w_ih, w_hh, b_ih, b_hh)
    )(token_ids)


# ---------------------------------------------------------------------------
# Tree flattening glue (host-side Python recursion, same order as the module).
# ---------------------------------------------------------------------------
def flatten_tree(tree):
    if isinstance(tree, int):        # terminal node -> token id
        return [tree]
    ids = []
    for child in tree:
        ids += flatten_tree(child)
    return ids


if __name__ == "__main__":
    INPUT_SIZE = 16   # vocab size
    HIDDEN = 32

    # Two small synthetic trees (8 leaves each), batched together.
    tree_a = ((3, (7, 1)), ((0, 12), (5, (9, 14))))
    tree_b = (((2, 6), (11, 10)), (4, ((8, 13), 15)))
    ids_a = flatten_tree(tree_a)
    ids_b = flatten_tree(tree_b)
    token_ids = jnp.asarray([ids_a, ids_b], jnp.int32)        # (B, S) = (2, 8)

    # Deterministic parameter init (shapes match nn.Embedding / nn.RNN).
    key = jax.random.PRNGKey(0)
    k_emb, k_wih, k_whh, k_bih, k_bhh = jax.random.split(key, 5)
    bound = 1.0 / (HIDDEN ** 0.5)
    emb  = jax.random.normal(k_emb, (INPUT_SIZE, HIDDEN), jnp.float32)
    w_ih = jax.random.uniform(k_wih, (HIDDEN, HIDDEN), jnp.float32, -bound, bound)
    w_hh = jax.random.uniform(k_whh, (HIDDEN, HIDDEN), jnp.float32, -bound, bound)
    b_ih = jax.random.uniform(k_bih, (HIDDEN,), jnp.float32, -bound, bound)
    b_hh = jax.random.uniform(k_bhh, (HIDDEN,), jnp.float32, -bound, bound)

    # Batched path (primary).
    h_pallas = rnn_forward_pallas(token_ids, emb, w_ih, w_hh, b_ih, b_hh)
    h_pallas = jax.block_until_ready(h_pallas)
    h_ref = rnn_forward_ref(token_ids, emb, w_ih, w_hh, b_ih, b_hh)
    assert h_pallas.shape == (2, HIDDEN)
    assert jnp.allclose(h_pallas, h_ref, atol=2e-5, rtol=2e-5), "batched mismatch"

    # Single-tree path (matches the PyTorch module's forward exactly).
    h_one = rnn_forward_pallas(token_ids[0], emb, w_ih, w_hh, b_ih, b_hh)
    h_one = jax.block_until_ready(h_one)
    h_one_ref = rnn_forward_ref(token_ids[0], emb, w_ih, w_hh, b_ih, b_hh)
    assert h_one.shape == (HIDDEN,)
    assert jnp.allclose(h_one, h_one_ref, atol=2e-5, rtol=2e-5), "single mismatch"

    print("KERNEL_OK")
</pallas_src>

<mosaic_0001>
module attributes {stable_mosaic.version = 11 : i64} {
  func.func @rnn_kernel(%arg0: memref<64x128xf32, #tpu.memory_space<vmem>>, %arg1: memref<128x128xf32, #tpu.memory_space<vmem>>, %arg2: memref<128x128xf32, #tpu.memory_space<vmem>>, %arg3: memref<1x128xf32, #tpu.memory_space<vmem>>, %arg4: memref<8x128xf32, #tpu.memory_space<vmem>>, %arg5: memref<64x128xf32, #tpu.memory_space<vmem>>) attributes {dimension_semantics = [], scalar_prefetch = 0 : i64, scratch_operands = 1 : i64, tpu.core_type = #tpu.core_type<tc>} {
    %c0 = arith.constant 0 : index
    %c0_0 = arith.constant 0 : index
    %0 = vector.load %arg0[%c0, %c0_0] : memref<64x128xf32, #tpu.memory_space<vmem>>, vector<64x128xf32>
    %c0_1 = arith.constant 0 : index
    %c0_2 = arith.constant 0 : index
    %1 = vector.load %arg1[%c0_1, %c0_2] : memref<128x128xf32, #tpu.memory_space<vmem>>, vector<128x128xf32>
    %cst = arith.constant dense<0.000000e+00> : vector<64x128xf32>
    %2 = tpu.matmul %0, %1, %cst {dimension_numbers = #tpu.dot_dimension_numbers<[1], [0], [0], [1], [0, 0, 1, 1], [], []>} : vector<64x128xf32>, vector<128x128xf32>, vector<64x128xf32> -> vector<64x128xf32>
    %c0_3 = arith.constant 0 : index
    %c0_4 = arith.constant 0 : index
    %3 = vector.load %arg3[%c0_3, %c0_4] : memref<1x128xf32, #tpu.memory_space<vmem>>, vector<1x128xf32>
    %4 = vector.broadcast %3 : vector<1x128xf32> to vector<64x128xf32>
    %5 = arith.addf %2, %4 : vector<64x128xf32>
    %c0_5 = arith.constant 0 : index
    %c0_6 = arith.constant 0 : index
    %6 = vector.load %arg5[%c0_5, %c0_6] : memref<64x128xf32, #tpu.memory_space<vmem>>, vector<64x128xf32>
    tpu.vector_store %arg5[%c0_5, %c0_6], %5 {strides = array<i32>} : memref<64x128xf32, #tpu.memory_space<vmem>>, vector<64x128xf32>,
    %cst_7 = arith.constant 0.000000e+00 : f32
    %7 = vector.broadcast %cst_7 : f32 to vector<8x128xf32>
    %c0_i32 = arith.constant 0 : i32
    %c8_i32 = arith.constant 8 : i32
    %8 = arith.muli %c0_i32, %c8_i32 : i32
    %9 = tpu.assume_multiple %8, 8 : i32
    %10 = arith.index_cast %9 : i32 to index
    %c0_8 = arith.constant 0 : index
    %11 = vector.load %arg5[%10, %c0_8] : memref<64x128xf32, #tpu.memory_space<vmem>>, vector<8x128xf32>
    %c0_9 = arith.constant 0 : index
    %c0_10 = arith.constant 0 : index
    %12 = vector.load %arg2[%c0_9, %c0_10] : memref<128x128xf32, #tpu.memory_space<vmem>>, vector<128x128xf32>
    %cst_11 = arith.constant dense<0.000000e+00> : vector<8x128xf32>
    %13 = tpu.matmul %7, %12, %cst_11 {dimension_numbers = #tpu.dot_dimension_numbers<[1], [0], [0], [1], [0, 0, 1, 1], [], []>} : vector<8x128xf32>, vector<128x128xf32>, vector<8x128xf32> -> vector<8x128xf32>
    %14 = arith.addf %11, %13 : vector<8x128xf32>
    %15 = math.tanh %14 : vector<8x128xf32>
    %c1_i32 = arith.constant 1 : i32
    %c8_i32_12 = arith.constant 8 : i32
    %16 = arith.muli %c1_i32, %c8_i32_12 : i32
    %17 = tpu.assume_multiple %16, 8 : i32
    %18 = arith.index_cast %17 : i32 to index
    %c0_13 = arith.constant 0 : index
    %19 = vector.load %arg5[%18, %c0_13] : memref<64x128xf32, #tpu.memory_space<vmem>>, vector<8x128xf32>
    %c0_14 = arith.constant 0 : index
    %c0_15 = arith.constant 0 : index
    %20 = vector.load %arg2[%c0_14, %c0_15] : memref<128x128xf32, #tpu.memory_space<vmem>>, vector<128x128xf32>
    %cst_16 = arith.constant dense<0.000000e+00> : vector<8x128xf32>
    %21 = tpu.matmul %15, %20, %cst_16 {dimension_numbers = #tpu.dot_dimension_numbers<[1], [0], [0], [1], [0, 0, 1, 1], [], []>} : vector<8x128xf32>, vector<128x128xf32>, vector<8x128xf32> -> vector<8x128xf32>
    %22 = arith.addf %19, %21 : vector<8x128xf32>
    %23 = math.tanh %22 : vector<8x128xf32>
    %c2_i32 = arith.constant 2 : i32
    %c8_i32_17 = arith.constant 8 : i32
    %24 = arith.muli %c2_i32, %c8_i32_17 : i32
    %25 = tpu.assume_multiple %24, 8 : i32
    %26 = arith.index_cast %25 : i32 to index
    %c0_18 = arith.constant 0 : index
    %27 = vector.load %arg5[%26, %c0_18] : memref<64x128xf32, #tpu.memory_space<vmem>>, vector<8x128xf32>
    %c0_19 = arith.constant 0 : index
    %c0_20 = arith.constant 0 : index
    %28 = vector.load %arg2[%c0_19, %c0_20] : memref<128x128xf32, #tpu.memory_space<vmem>>, vector<128x128xf32>
    %cst_21 = arith.constant dense<0.000000e+00> : vector<8x128xf32>
    %29 = tpu.matmul %23, %28, %cst_21 {dimension_numbers = #tpu.dot_dimension_numbers<[1], [0], [0], [1], [0, 0, 1, 1], [], []>} : vector<8x128xf32>, vector<128x128xf32>, vector<8x128xf32> -> vector<8x128xf32>
    %30 = arith.addf %27, %29 : vector<8x128xf32>
    %31 = math.tanh %30 : vector<8x128xf32>
    %c3_i32 = arith.constant 3 : i32
    %c8_i32_22 = arith.constant 8 : i32
    %32 = arith.muli %c3_i32, %c8_i32_22 : i32
    %33 = tpu.assume_multiple %32, 8 : i32
    %34 = arith.index_cast %33 : i32 to index
    %c0_23 = arith.constant 0 : index
    %35 = vector.load %arg5[%34, %c0_23] : memref<64x128xf32, #tpu.memory_space<vmem>>, vector<8x128xf32>
    %c0_24 = arith.constant 0 : index
    %c0_25 = arith.constant 0 : index
    %36 = vector.load %arg2[%c0_24, %c0_25] : memref<128x128xf32, #tpu.memory_space<vmem>>, vector<128x128xf32>
    %cst_26 = arith.constant dense<0.000000e+00> : vector<8x128xf32>
    %37 = tpu.matmul %31, %36, %cst_26 {dimension_numbers = #tpu.dot_dimension_numbers<[1], [0], [0], [1], [0, 0, 1, 1], [], []>} : vector<8x128xf32>, vector<128x128xf32>, vector<8x128xf32> -> vector<8x128xf32>
    %38 = arith.addf %35, %37 : vector<8x128xf32>
    %39 = math.tanh %38 : vector<8x128xf32>
    %c4_i32 = arith.constant 4 : i32
    %c8_i32_27 = arith.constant 8 : i32
    %40 = arith.muli %c4_i32, %c8_i32_27 : i32
    %41 = tpu.assume_multiple %40, 8 : i32
    %42 = arith.index_cast %41 : i32 to index
    %c0_28 = arith.constant 0 : index
    %43 = vector.load %arg5[%42, %c0_28] : memref<64x128xf32, #tpu.memory_space<vmem>>, vector<8x128xf32>
    %c0_29 = arith.constant 0 : index
    %c0_30 = arith.constant 0 : index
    %44 = vector.load %arg2[%c0_29, %c0_30] : memref<128x128xf32, #tpu.memory_space<vmem>>, vector<128x128xf32>
    %cst_31 = arith.constant dense<0.000000e+00> : vector<8x128xf32>
    %45 = tpu.matmul %39, %44, %cst_31 {dimension_numbers = #tpu.dot_dimension_numbers<[1], [0], [0], [1], [0, 0, 1, 1], [], []>} : vector<8x128xf32>, vector<128x128xf32>, vector<8x128xf32> -> vector<8x128xf32>
    %46 = arith.addf %43, %45 : vector<8x128xf32>
    %47 = math.tanh %46 : vector<8x128xf32>
    %c5_i32 = arith.constant 5 : i32
    %c8_i32_32 = arith.constant 8 : i32
    %48 = arith.muli %c5_i32, %c8_i32_32 : i32
    %49 = tpu.assume_multiple %48, 8 : i32
    %50 = arith.index_cast %49 : i32 to index
    %c0_33 = arith.constant 0 : index
    %51 = vector.load %arg5[%50, %c0_33] : memref<64x128xf32, #tpu.memory_space<vmem>>, vector<8x128xf32>
    %c0_34 = arith.constant 0 : index
    %c0_35 = arith.constant 0 : index
    %52 = vector.load %arg2[%c0_34, %c0_35] : memref<128x128xf32, #tpu.memory_space<vmem>>, vector<128x128xf32>
    %cst_36 = arith.constant dense<0.000000e+00> : vector<8x128xf32>
    %53 = tpu.matmul %47, %52, %cst_36 {dimension_numbers = #tpu.dot_dimension_numbers<[1], [0], [0], [1], [0, 0, 1, 1], [], []>} : vector<8x128xf32>, vector<128x128xf32>, vector<8x128xf32> -> vector<8x128xf32>
    %54 = arith.addf %51, %53 : vector<8x128xf32>
    %55 = math.tanh %54 : vector<8x128xf32>
    %c6_i32 = arith.constant 6 : i32
    %c8_i32_37 = arith.constant 8 : i32
    %56 = arith.muli %c6_i32, %c8_i32_37 : i32
    %57 = tpu.assume_multiple %56, 8 : i32
    %58 = arith.index_cast %57 : i32 to index
    %c0_38 = arith.constant 0 : index
    %59 = vector.load %arg5[%58, %c0_38] : memref<64x128xf32, #tpu.memory_space<vmem>>, vector<8x128xf32>
    %c0_39 = arith.constant 0 : index
    %c0_40 = arith.constant 0 : index
    %60 = vector.load %arg2[%c0_39, %c0_40] : memref<128x128xf32, #tpu.memory_space<vmem>>, vector<128x128xf32>
    %cst_41 = arith.constant dense<0.000000e+00> : vector<8x128xf32>
    %61 = tpu.matmul %55, %60, %cst_41 {dimension_numbers = #tpu.dot_dimension_numbers<[1], [0], [0], [1], [0, 0, 1, 1], [], []>} : vector<8x128xf32>, vector<128x128xf32>, vector<8x128xf32> -> vector<8x128xf32>
    %62 = arith.addf %59, %61 : vector<8x128xf32>
    %63 = math.tanh %62 : vector<8x128xf32>
    %c7_i32 = arith.constant 7 : i32
    %c8_i32_42 = arith.constant 8 : i32
    %64 = arith.muli %c7_i32, %c8_i32_42 : i32
    %65 = tpu.assume_multiple %64, 8 : i32
    %66 = arith.index_cast %65 : i32 to index
    %c0_43 = arith.constant 0 : index
    %67 = vector.load %arg5[%66, %c0_43] : memref<64x128xf32, #tpu.memory_space<vmem>>, vector<8x128xf32>
    %c0_44 = arith.constant 0 : index
    %c0_45 = arith.constant 0 : index
    %68 = vector.load %arg2[%c0_44, %c0_45] : memref<128x128xf32, #tpu.memory_space<vmem>>, vector<128x128xf32>
    %cst_46 = arith.constant dense<0.000000e+00> : vector<8x128xf32>
    %69 = tpu.matmul %63, %68, %cst_46 {dimension_numbers = #tpu.dot_dimension_numbers<[1], [0], [0], [1], [0, 0, 1, 1], [], []>} : vector<8x128xf32>, vector<128x128xf32>, vector<8x128xf32> -> vector<8x128xf32>
    %70 = arith.addf %67, %69 : vector<8x128xf32>
    %71 = math.tanh %70 : vector<8x128xf32>
    %c8_i32_47 = arith.constant 8 : i32
    %c0_48 = arith.constant 0 : index
    %c0_49 = arith.constant 0 : index
    %72 = vector.load %arg4[%c0_48, %c0_49] : memref<8x128xf32, #tpu.memory_space<vmem>>, vector<8x128xf32>
    tpu.vector_store %arg4[%c0_48, %c0_49], %71 {strides = array<i32>} : memref<8x128xf32, #tpu.memory_space<vmem>>, vector<8x128xf32>,
    return
  }
}

</mosaic_0001>

<llo_original>
// kernel: rnn_forward_pallas.1
$region0: #{rnn_forward_pallas.1}
  #allocation0 [shape = 'u32[]', space=smem, size = 0x4, offset = 0x4, fixed_abs, tag = 'smem constant byte address 0x4 - core index']
  #allocation1 [shape = 'u32[144,128]{1,0:T(1,128)}', space=vmem, size = 0x12000, scoped, tag = 'internal scratch']
  #allocation2 [shape = 'f32[64,128]{1,0:T(8,128)}', space=vmem, size = 0x8000, scoped, tag = 'scratch operand']
  %s0 = inlined_call_operand.vmem [shape: f32[64,128], index: 0, kind: input, shape index: {}]
  %s1 = inlined_call_operand.vmem [shape: f32[128,128], index: 1, kind: input, shape index: {}]
  %s2 = inlined_call_operand.vmem [shape: f32[128,128], index: 2, kind: input, shape index: {}]
  %s3 = inlined_call_operand.vmem [shape: f32[1,128], index: 3, kind: input, shape index: {}]
  %s4 = inlined_call_operand.vmem [shape: f32[8,128], index: 4, kind: output, shape index: {}]
  %s5 = sld [smem:[#allocation0]]
  $region26: #{rnn_forward_pallas.1} parent=0
    _
  %s7 = ssub.s32 1, %s5
  %s8 = scalar_select 0, %s7, %s5
  // Predicated region
  $region2: #{rnn_forward_pallas.1} parent=0 // pred_check
    _
  $region3: #{rnn_forward_pallas.1} parent=0 // pred_check_branch
    %10 = sbr.rel (0) target = $region5
  $region4: #{rnn_forward_pallas.1} parent=0 // pred_region
    _
  $region5: #{rnn_forward_pallas.1} parent=0 // pred_fallthru
    _
  // Predicated region
  $region6: #{rnn_forward_pallas.1} parent=0 // pred_check
    _
  $region7: #{rnn_forward_pallas.1} parent=0 // pred_check_branch
    %12 = sbr.rel (0) target = $region9
  $region8: #{rnn_forward_pallas.1} parent=0 // pred_region
    _
  $region9: #{rnn_forward_pallas.1} parent=0 // pred_fallthru
    _
  // Predicated region
  $region10: #{rnn_forward_pallas.1} parent=0 // pred_check
    _
  $region11: #{rnn_forward_pallas.1} parent=0 // pred_check_branch
    %14 = sbr.rel (0) target = $region13
  $region12: #{rnn_forward_pallas.1} parent=0 // pred_region
    _
  $region13: #{rnn_forward_pallas.1} parent=0 // pred_fallthru
    _
  // Predicated region
  $region14: #{rnn_forward_pallas.1} parent=0 // pred_check
    _
  $region15: #{rnn_forward_pallas.1} parent=0 // pred_check_branch
    %16 = sbr.rel (0) target = $region17
  $region16: #{rnn_forward_pallas.1} parent=0 // pred_region
    _
  $region17: #{rnn_forward_pallas.1} parent=0 // pred_fallthru
    _
  %v17 = vld [vmem:[%s0] sm:$0xff]
  %v18 = vld [vmem:[%s0 + $0x8] sm:$0xff]
  %v19 = vld [vmem:[%s0 + $0x10] sm:$0xff]
  %v20 = vld [vmem:[%s0 + $0x18] sm:$0xff]
  %v21 = vld [vmem:[%s0 + $0x20] sm:$0xff]
  %v22 = vld [vmem:[%s0 + $0x28] sm:$0xff]
  %v23 = vld [vmem:[%s0 + $0x30] sm:$0xff]
  %v24 = vld [vmem:[%s0 + $0x38] sm:$0xff]
  %v25 = vld [vmem:[%s1] sm:$0xff]
  %v26 = vld [vmem:[%s1 + $0x8] sm:$0xff]
  %v27 = vld [vmem:[%s1 + $0x10] sm:$0xff]
  %v28 = vld [vmem:[%s1 + $0x18] sm:$0xff]
  %v29 = vld [vmem:[%s1 + $0x20] sm:$0xff]
  %v30 = vld [vmem:[%s1 + $0x28] sm:$0xff]
  %v31 = vld [vmem:[%s1 + $0x30] sm:$0xff]
  %v32 = vld [vmem:[%s1 + $0x38] sm:$0xff]
  %v33 = vld [vmem:[%s1 + $0x40] sm:$0xff]
  %v34 = vld [vmem:[%s1 + $0x48] sm:$0xff]
  %v35 = vld [vmem:[%s1 + $0x50] sm:$0xff]
  %v36 = vld [vmem:[%s1 + $0x58] sm:$0xff]
  %v37 = vld [vmem:[%s1 + $0x60] sm:$0xff]
  %v38 = vld [vmem:[%s1 + $0x68] sm:$0xff]
  %v39 = vld [vmem:[%s1 + $0x70] sm:$0xff]
  %v40 = vld [vmem:[%s1 + $0x78] sm:$0xff]
  %v41 = vld [vmem:[%s3] sm:$0x1]
  %v43 = vlaneseq
  %v44 = vshrl.u32 %v43, 7
  %v45 = vsub.s32 0, %v44
  %v46 = vrot.slane %v41, %v45
  %48 = vmatprep.subr.mxu0 0.0
  %49 = vmatpush1.msra.mxu0 %v25
  %50 = vmatprep.subr.mxu0 0.0
  %51 = vmatpush1.msra.mxu0 %v26
  %52 = vmatprep.subr.mxu0 0.0
  %53 = vmatpush1.msra.mxu0 %v27
  %54 = vmatprep.subr.mxu0 0.0
  %55 = vmatpush1.msra.mxu0 %v28
  %56 = vmatprep.subr.mxu0 0.0
  %57 = vmatpush1.msra.mxu0 %v29
  %58 = vmatprep.subr.mxu0 0.0
  %59 = vmatpush1.msra.mxu0 %v30
  %60 = vmatprep.subr.mxu0 0.0
  %61 = vmatpush1.msra.mxu0 %v31
  %62 = vmatprep.subr.mxu0 0.0
  %63 = vmatpush1.msra.mxu0 %v32
  %64 = vmatprep.subr.mxu0 0.0
  %65 = vmatpush1.msra.mxu0 %v33
  %66 = vmatprep.subr.mxu0 0.0
  %67 = vmatpush1.msra.mxu0 %v34
  %68 = vmatprep.subr.mxu0 0.0
  %69 = vmatpush1.msra.mxu0 %v35
  %70 = vmatprep.subr.mxu0 0.0
  %71 = vmatpush1.msra.mxu0 %v36
  %72 = vmatprep.subr.mxu0 0.0
  %73 = vmatpush1.msra.mxu0 %v37
  %74 = vmatprep.subr.mxu0 0.0
  %75 = vmatpush1.msra.mxu0 %v38
  %76 = vmatprep.subr.mxu0 0.0
  %77 = vmatpush1.msra.mxu0 %v39
  %78 = vmatprep.subr.mxu0 0.0
  %79 = vmatpush1.msra.mxu0 %v40
  %80 = vmatprep.subr.mxu0 0.0
  %81 = vmatpush1.msra.mxu0 0.0
  %82 = vmatprep.subr.mxu0 0.0
  %83 = vmatpush1.msra.mxu0 0.0
  %84 = vmatprep.subr.mxu0 0.0
  %85 = vmatpush1.msra.mxu0 0.0
  %86 = vmatprep.subr.mxu0 0.0
  %87 = vmatpush1.msra.mxu0 0.0
  %88 = vmatprep.subr.mxu0 0.0
  %89 = vmatpush1.msra.mxu0 0.0
  %90 = vmatprep.subr.mxu0 0.0
  %91 = vmatpush1.msra.mxu0 0.0
  %92 = vmatprep.subr.mxu0 0.0
  %93 = vmatpush1.msra.mxu0 0.0
  %94 = vmatprep.subr.mxu0 0.0
  %95 = vmatpush1.msra.mxu0 0.0
  %96 = vmatprep.subr.mxu0 0.0
  %97 = vmatpush1.msra.mxu0 0.0
  %98 = vmatprep.subr.mxu0 0.0
  %99 = vmatpush1.msra.mxu0 0.0
  %100 = vmatprep.subr.mxu0 0.0
  %101 = vmatpush1.msra.mxu0 0.0
  %102 = vmatprep.subr.mxu0 0.0
  %103 = vmatpush1.msra.mxu0 0.0
  %104 = vmatprep.subr.mxu0 0.0
  %105 = vmatpush1.msra.mxu0 0.0
  %106 = vmatprep.subr.mxu0 0.0
  %107 = vmatpush1.msra.mxu0 0.0
  %108 = vmatprep.subr.mxu0 0.0
  %109 = vmatpush1.msra.mxu0 0.0
  %110 = vmatprep.subr.mxu0 0.0
  %111 = vmatpush1.msra.mxu0 0.0
  %112 = vmatprep.mubr.f32.mxu0 0.0
  %113 = vmatmul.mubr.f32.gmra.mrb[0].mxu0 %v17
  %v114 = vpop.f32.mrb[0].mxu0
  %v115 = vadd.f32 %v46, %v114
  %v116 = vpop.f32.mrb[0].mxu0
  %117 = vmatprep.mubr.f32.mxu0 0.0
  %118 = vmatmul.mubr.f32.gmra.mrb[0].mxu0 %v18
  %v119 = vpop.f32.mrb[0].mxu0
  %v120 = vadd.f32 %v46, %v119
  %v121 = vpop.f32.mrb[0].mxu0
  %122 = vmatprep.mubr.f32.mxu0 0.0
  %123 = vmatmul.mubr.f32.gmra.mrb[0].mxu0 %v19
  %v124 = vpop.f32.mrb[0].mxu0
  %v125 = vadd.f32 %v46, %v124
  %v126 = vpop.f32.mrb[0].mxu0
  %127 = vmatprep.mubr.f32.mxu0 0.0
  %128 = vmatmul.mubr.f32.gmra.mrb[0].mxu0 %v20
  %v129 = vpop.f32.mrb[0].mxu0
  %v130 = vadd.f32 %v46, %v129
  %v131 = vpop.f32.mrb[0].mxu0
  %132 = vmatprep.mubr.f32.mxu0 0.0
  %133 = vmatmul.mubr.f32.gmra.mrb[0].mxu0 %v21
  %v134 = vpop.f32.mrb[0].mxu0
  %v135 = vadd.f32 %v46, %v134
  %v136 = vpop.f32.mrb[0].mxu0
  %137 = vmatprep.mubr.f32.mxu0 0.0
  %138 = vmatmul.mubr.f32.gmra.mrb[0].mxu0 %v22
  %v139 = vpop.f32.mrb[0].mxu0
  %v140 = vadd.f32 %v46, %v139
  %v141 = vpop.f32.mrb[0].mxu0
  %142 = vmatprep.mubr.f32.mxu0 0.0
  %143 = vmatmul.mubr.f32.gmra.mrb[0].mxu0 %v23
  %v144 = vpop.f32.mrb[0].mxu0
  %v145 = vadd.f32 %v46, %v144
  %v146 = vpop.f32.mrb[0].mxu0
  %147 = vmatprep.mubr.f32.mxu0 0.0
  %148 = vmatmul.mubr.f32.gmra.mrb[0].mxu0 %v24
  %v149 = vpop.f32.mrb[0].mxu0
  %v150 = vadd.f32 %v46, %v149
  %v151 = vpop.f32.mrb[0].mxu0
  %152 = vdwg.mxu0
  %153 = vst [vmem:[#allocation2] sm:$0xff] %v115
  %154 = vst [vmem:[#allocation2 + $0x8] sm:$0xff] %v120
  %155 = vst [vmem:[#allocation2 + $0x10] sm:$0xff] %v125
  %156 = vst [vmem:[#allocation2 + $0x18] sm:$0xff] %v130
  %157 = vst [vmem:[#allocation2 + $0x20] sm:$0xff] %v135
  %158 = vst [vmem:[#allocation2 + $0x28] sm:$0xff] %v140
  %159 = vst [vmem:[#allocation2 + $0x30] sm:$0xff] %v145
  %160 = vst [vmem:[#allocation2 + $0x38] sm:$0xff] %v150
  %v161 = vld [vmem:[#allocation2] sm:$0xff]
  %v162 = vld [vmem:[%s2] sm:$0xff]
  %v163 = vld [vmem:[%s2 + $0x8] sm:$0xff]
  %v164 = vld [vmem:[%s2 + $0x10] sm:$0xff]
  %v165 = vld [vmem:[%s2 + $0x18] sm:$0xff]
  %v166 = vld [vmem:[%s2 + $0x20] sm:$0xff]
  %v167 = vld [vmem:[%s2 + $0x28] sm:$0xff]
  %v168 = vld [vmem:[%s2 + $0x30] sm:$0xff]
  %v169 = vld [vmem:[%s2 + $0x38] sm:$0xff]
  %v170 = vld [vmem:[%s2 + $0x40] sm:$0xff]
  %v171 = vld [vmem:[%s2 + $0x48] sm:$0xff]
  %v172 = vld [vmem:[%s2 + $0x50] sm:$0xff]
  %v173 = vld [vmem:[%s2 + $0x58] sm:$0xff]
  %v174 = vld [vmem:[%s2 + $0x60] sm:$0xff]
  %v175 = vld [vmem:[%s2 + $0x68] sm:$0xff]
  %v176 = vld [vmem:[%s2 + $0x70] sm:$0xff]
  %v177 = vld [vmem:[%s2 + $0x78] sm:$0xff]
  %178 = vmatprep.subr.mxu0 0.0
  %179 = vmatpush1.msra.mxu0 %v162
  %180 = vmatprep.subr.mxu0 0.0
  %181 = vmatpush1.msra.mxu0 %v163
  %182 = vmatprep.subr.mxu0 0.0
  %183 = vmatpush1.msra.mxu0 %v164
  %184 = vmatprep.subr.mxu0 0.0
  %185 = vmatpush1.msra.mxu0 %v165
  %186 = vmatprep.subr.mxu0 0.0
  %187 = vmatpush1.msra.mxu0 %v166
  %188 = vmatprep.subr.mxu0 0.0
  %189 = vmatpush1.msra.mxu0 %v167
  %190 = vmatprep.subr.mxu0 0.0
  %191 = vmatpush1.msra.mxu0 %v168
  %192 = vmatprep.subr.mxu0 0.0
  %193 = vmatpush1.msra.mxu0 %v169
  %194 = vmatprep.subr.mxu0 0.0
  %195 = vmatpush1.msra.mxu0 %v170
  %196 = vmatprep.subr.mxu0 0.0
  %197 = vmatpush1.msra.mxu0 %v171
  %198 = vmatprep.subr.mxu0 0.0
  %199 = vmatpush1.msra.mxu0 %v172
  %200 = vmatprep.subr.mxu0 0.0
  %201 = vmatpush1.msra.mxu0 %v173
  %202 = vmatprep.subr.mxu0 0.0
  %203 = vmatpush1.msra.mxu0 %v174
  %204 = vmatprep.subr.mxu0 0.0
  %205 = vmatpush1.msra.mxu0 %v175
  %206 = vmatprep.subr.mxu0 0.0
  %207 = vmatpush1.msra.mxu0 %v176
  %208 = vmatprep.subr.mxu0 0.0
  %209 = vmatpush1.msra.mxu0 %v177
  %210 = vmatprep.subr.mxu0 0.0
  %211 = vmatpush1.msra.mxu0 0.0
  %212 = vmatprep.subr.mxu0 0.0
  %213 = vmatpush1.msra.mxu0 0.0
  %214 = vmatprep.subr.mxu0 0.0
  %215 = vmatpush1.msra.mxu0 0.0
  %216 = vmatprep.subr.mxu0 0.0
  %217 = vmatpush1.msra.mxu0 0.0
  %218 = vmatprep.subr.mxu0 0.0
  %219 = vmatpush1.msra.mxu0 0.0
  %220 = vmatprep.subr.mxu0 0.0
  %221 = vmatpush1.msra.mxu0 0.0
  %222 = vmatprep.subr.mxu0 0.0
  %223 = vmatpush1.msra.mxu0 0.0
  %224 = vmatprep.subr.mxu0 0.0
  %225 = vmatpush1.msra.mxu0 0.0
  %226 = vmatprep.subr.mxu0 0.0
  %227 = vmatpush1.msra.mxu0 0.0
  %228 = vmatprep.subr.mxu0 0.0
  %229 = vmatpush1.msra.mxu0 0.0
  %230 = vmatprep.subr.mxu0 0.0
  %231 = vmatpush1.msra.mxu0 0.0
  %232 = vmatprep.subr.mxu0 0.0
  %233 = vmatpush1.msra.mxu0 0.0
  %234 = vmatprep.subr.mxu0 0.0
  %235 = vmatpush1.msra.mxu0 0.0
  %236 = vmatprep.subr.mxu0 0.0
  %237 = vmatpush1.msra.mxu0 0.0
  %238 = vmatprep.subr.mxu0 0.0
  %239 = vmatpush1.msra.mxu0 0.0
  %240 = vmatprep.subr.mxu0 0.0
  %241 = vmatpush1.msra.mxu0 0.0
  %242 = vmatprep.mubr.f32.mxu0 0.0
  %243 = vmatmul.mubr.f32.gmra.mrb[0].mxu0 0.0
  %v244 = vpop.f32.mrb[0].mxu0
  %v245 = vadd.f32 0.0, %v244
  %v246 = vpop.f32.mrb[0].mxu0
  %247 = vdwg.mxu0
  %v248 = vadd.f32 %v161, %v245
  %v249 = vtanh.pop %v248
  %s250 = scalar_lea.vmem [#allocation2], 8
  %v251 = vld [vmem:[%s250] sm:$0xff]
  %252 = vmatprep.subr.mxu0 0.0
  %253 = vmatpush1.msra.mxu0 %v162
  %254 = vmatprep.subr.mxu0 0.0
  %255 = vmatpush1.msra.mxu0 %v163
  %256 = vmatprep.subr.mxu0 0.0
  %257 = vmatpush1.msra.mxu0 %v164
  %258 = vmatprep.subr.mxu0 0.0
  %259 = vmatpush1.msra.mxu0 %v165
  %260 = vmatprep.subr.mxu0 0.0
  %261 = vmatpush1.msra.mxu0 %v166
  %262 = vmatprep.subr.mxu0 0.0
  %263 = vmatpush1.msra.mxu0 %v167
  %264 = vmatprep.subr.mxu0 0.0
  %265 = vmatpush1.msra.mxu0 %v168
  %266 = vmatprep.subr.mxu0 0.0
  %267 = vmatpush1.msra.mxu0 %v169
  %268 = vmatprep.subr.mxu0 0.0
  %269 = vmatpush1.msra.mxu0 %v170
  %270 = vmatprep.subr.mxu0 0.0
  %271 = vmatpush1.msra.mxu0 %v171
  %272 = vmatprep.subr.mxu0 0.0
  %273 = vmatpush1.msra.mxu0 %v172
  %274 = vmatprep.subr.mxu0 0.0
  %275 = vmatpush1.msra.mxu0 %v173
  %276 = vmatprep.subr.mxu0 0.0
  %277 = vmatpush1.msra.mxu0 %v174
  %278 = vmatprep.subr.mxu0 0.0
  %279 = vmatpush1.msra.mxu0 %v175
  %280 = vmatprep.subr.mxu0 0.0
  %281 = vmatpush1.msra.mxu0 %v176
  %282 = vmatprep.subr.mxu0 0.0
  %283 = vmatpush1.msra.mxu0 %v177
  %284 = vmatprep.subr.mxu0 0.0
  %285 = vmatpush1.msra.mxu0 0.0
  %286 = vmatprep.subr.mxu0 0.0
  %287 = vmatpush1.msra.mxu0 0.0
  %288 = vmatprep.subr.mxu0 0.0
  %289 = vmatpush1.msra.mxu0 0.0
  %290 = vmatprep.subr.mxu0 0.0
  %291 = vmatpush1.msra.mxu0 0.0
  %292 = vmatprep.subr.mxu0 0.0
  %293 = vmatpush1.msra.mxu0 0.0
  %294 = vmatprep.subr.mxu0 0.0
  %295 = vmatpush1.msra.mxu0 0.0
  %296 = vmatprep.subr.mxu0 0.0
  %297 = vmatpush1.msra.mxu0 0.0
  %298 = vmatprep.subr.mxu0 0.0
  %299 = vmatpush1.msra.mxu0 0.0
  %300 = vmatprep.subr.mxu0 0.0
  %301 = vmatpush1.msra.mxu0 0.0
  %302 = vmatprep.subr.mxu0 0.0
  %303 = vmatpush1.msra.mxu0 0.0
  %304 = vmatprep.subr.mxu0 0.0
  %305 = vmatpush1.msra.mxu0 0.0
  %306 = vmatprep.subr.mxu0 0.0
  %307 = vmatpush1.msra.mxu0 0.0
  %308 = vmatprep.subr.mxu0 0.0
  %309 = vmatpush1.msra.mxu0 0.0
  %310 = vmatprep.subr.mxu0 0.0
  %311 = vmatpush1.msra.mxu0 0.0
  %312 = vmatprep.subr.mxu0 0.0
  %313 = vmatpush1.msra.mxu0 0.0
  %314 = vmatprep.subr.mxu0 0.0
  %315 = vmatpush1.msra.mxu0 0.0
  %316 = vmatprep.mubr.f32.mxu0 0.0
  %317 = vmatmul.mubr.f32.gmra.mrb[0].mxu0 %v249
  %v318 = vpop.f32.mrb[0].mxu0
  %v319 = vadd.f32 0.0, %v318
  %v320 = vpop.f32.mrb[0].mxu0
  %321 = vdwg.mxu0
  %v322 = vadd.f32 %v251, %v319
  %v323 = vtanh.pop %v322
  %s324 = scalar_lea.vmem [#allocation2], 16
  %v325 = vld [vmem:[%s324] sm:$0xff]
  %326 = vmatprep.subr.mxu0 0.0
  %327 = vmatpush1.msra.mxu0 %v162
  %328 = vmatprep.subr.mxu0 0.0
  %329 = vmatpush1.msra.mxu0 %v163
  %330 = vmatprep.subr.mxu0 0.0
  %331 = vmatpush1.msra.mxu0 %v164
  %332 = vmatprep.subr.mxu0 0.0
  %333 = vmatpush1.msra.mxu0 %v165
  %334 = vmatprep.subr.mxu0 0.0
  %335 = vmatpush1.msra.mxu0 %v166
  %336 = vmatprep.subr.mxu0 0.0
  %337 = vmatpush1.msra.mxu0 %v167
  %338 = vmatprep.subr.mxu0 0.0
  %339 = vmatpush1.msra.mxu0 %v168
  %340 = vmatprep.subr.mxu0 0.0
  %341 = vmatpush1.msra.mxu0 %v169
  %342 = vmatprep.subr.mxu0 0.0
  %343 = vmatpush1.msra.mxu0 %v170
  %344 = vmatprep.subr.mxu0 0.0
  %345 = vmatpush1.msra.mxu0 %v171
  %346 = vmatprep.subr.mxu0 0.0
  %347 = vmatpush1.msra.mxu0 %v172
  %348 = vmatprep.subr.mxu0 0.0
  %349 = vmatpush1.msra.mxu0 %v173
  %350 = vmatprep.subr.mxu0 0.0
  %351 = vmatpush1.msra.mxu0 %v174
  %352 = vmatprep.subr.mxu0 0.0
  %353 = vmatpush1.msra.mxu0 %v175
  %354 = vmatprep.subr.mxu0 0.0
  %355 = vmatpush1.msra.mxu0 %v176
  %356 = vmatprep.subr.mxu0 0.0
  %357 = vmatpush1.msra.mxu0 %v177
  %358 = vmatprep.subr.mxu0 0.0
  %359 = vmatpush1.msra.mxu0 0.0
  %360 = vmatprep.subr.mxu0 0.0
  %361 = vmatpush1.msra.mxu0 0.0
  %362 = vmatprep.subr.mxu0 0.0
  %363 = vmatpush1.msra.mxu0 0.0
  %364 = vmatprep.subr.mxu0 0.0
  %365 = vmatpush1.msra.mxu0 0.0
  %366 = vmatprep.subr.mxu0 0.0
  %367 = vmatpush1.msra.mxu0 0.0
  %368 = vmatprep.subr.mxu0 0.0
  %369 = vmatpush1.msra.mxu0 0.0
  %370 = vmatprep.subr.mxu0 0.0
  %371 = vmatpush1.msra.mxu0 0.0
  %372 = vmatprep.subr.mxu0 0.0
  %373 = vmatpush1.msra.mxu0 0.0
  %374 = vmatprep.subr.mxu0 0.0
  %375 = vmatpush1.msra.mxu0 0.0
  %376 = vmatprep.subr.mxu0 0.0
  %377 = vmatpush1.msra.mxu0 0.0
  %378 = vmatprep.subr.mxu0 0.0
  %379 = vmatpush1.msra.mxu0 0.0
  %380 = vmatprep.subr.mxu0 0.0
  %381 = vmatpush1.msra.mxu0 0.0
  %382 = vmatprep.subr.mxu0 0.0
  %383 = vmatpush1.msra.mxu0 0.0
  %384 = vmatprep.subr.mxu0 0.0
  %385 = vmatpush1.msra.mxu0 0.0
  %386 = vmatprep.subr.mxu0 0.0
  %387 = vmatpush1.msra.mxu0 0.0
  %388 = vmatprep.subr.mxu0 0.0
  %389 = vmatpush1.msra.mxu0 0.0
  %390 = vmatprep.mubr.f32.mxu0 0.0
  %391 = vmatmul.mubr.f32.gmra.mrb[0].mxu0 %v323
  %v392 = vpop.f32.mrb[0].mxu0
  %v393 = vadd.f32 0.0, %v392
  %v394 = vpop.f32.mrb[0].mxu0
  %395 = vdwg.mxu0
  %v396 = vadd.f32 %v325, %v393
  %v397 = vtanh.pop %v396
  %s398 = scalar_lea.vmem [#allocation2], 24
  %v399 = vld [vmem:[%s398] sm:$0xff]
  %400 = vmatprep.subr.mxu0 0.0
  %401 = vmatpush1.msra.mxu0 %v162
  %402 = vmatprep.subr.mxu0 0.0
  %403 = vmatpush1.msra.mxu0 %v163
  %404 = vmatprep.subr.mxu0 0.0
  %405 = vmatpush1.msra.mxu0 %v164
  %406 = vmatprep.subr.mxu0 0.0
  %407 = vmatpush1.msra.mxu0 %v165
  %408 = vmatprep.subr.mxu0 0.0
  %409 = vmatpush1.msra.mxu0 %v166
  %410 = vmatprep.subr.mxu0 0.0
  %411 = vmatpush1.msra.mxu0 %v167
  %412 = vmatprep.subr.mxu0 0.0
  %413 = vmatpush1.msra.mxu0 %v168
  %414 = vmatprep.subr.mxu0 0.0
  %415 = vmatpush1.msra.mxu0 %v169
  %416 = vmatprep.subr.mxu0 0.0
  %417 = vmatpush1.msra.mxu0 %v170
  %418 = vmatprep.subr.mxu0 0.0
  %419 = vmatpush1.msra.mxu0 %v171
  %420 = vmatprep.subr.mxu0 0.0
  %421 = vmatpush1.msra.mxu0 %v172
  %422 = vmatprep.subr.mxu0 0.0
  %423 = vmatpush1.msra.mxu0 %v173
  %424 = vmatprep.subr.mxu0 0.0
  %425 = vmatpush1.msra.mxu0 %v174
  %426 = vmatprep.subr.mxu0 0.0
  %427 = vmatpush1.msra.mxu0 %v175
  %428 = vmatprep.subr.mxu0 0.0
  %429 = vmatpush1.msra.mxu0 %v176
  %430 = vmatprep.subr.mxu0 0.0
  %431 = vmatpush1.msra.mxu0 %v177
  %432 = vmatprep.subr.mxu0 0.0
  %433 = vmatpush1.msra.mxu0 0.0
  %434 = vmatprep.subr.mxu0 0.0
  %435 = vmatpush1.msra.mxu0 0.0
  %436 = vmatprep.subr.mxu0 0.0
  %437 = vmatpush1.msra.mxu0 0.0
  %438 = vmatprep.subr.mxu0 0.0
  %439 = vmatpush1.msra.mxu0 0.0
  %440 = vmatprep.subr.mxu0 0.0
  %441 = vmatpush1.msra.mxu0 0.0
  %442 = vmatprep.subr.mxu0 0.0
  %443 = vmatpush1.msra.mxu0 0.0
  %444 = vmatprep.subr.mxu0 0.0
  %445 = vmatpush1.msra.mxu0 0.0
  %446 = vmatprep.subr.mxu0 0.0
  %447 = vmatpush1.msra.mxu0 0.0
  %448 = vmatprep.subr.mxu0 0.0
  %449 = vmatpush1.msra.mxu0 0.0
  %450 = vmatprep.subr.mxu0 0.0
  %451 = vmatpush1.msra.mxu0 0.0
  %452 = vmatprep.subr.mxu0 0.0
  %453 = vmatpush1.msra.mxu0 0.0
  %454 = vmatprep.subr.mxu0 0.0
  %455 = vmatpush1.msra.mxu0 0.0
  %456 = vmatprep.subr.mxu0 0.0
  %457 = vmatpush1.msra.mxu0 0.0
  %458 = vmatprep.subr.mxu0 0.0
  %459 = vmatpush1.msra.mxu0 0.0
  %460 = vmatprep.subr.mxu0 0.0
  %461 = vmatpush1.msra.mxu0 0.0
  %462 = vmatprep.subr.mxu0 0.0
  %463 = vmatpush1.msra.mxu0 0.0
  %464 = vmatprep.mubr.f32.mxu0 0.0
  %465 = vmatmul.mubr.f32.gmra.mrb[0].mxu0 %v397
  %v466 = vpop.f32.mrb[0].mxu0
  %v467 = vadd.f32 0.0, %v466
  %v468 = vpop.f32.mrb[0].mxu0
  %469 = vdwg.mxu0
  %v470 = vadd.f32 %v399, %v467
  %v471 = vtanh.pop %v470
  %s472 = scalar_lea.vmem [#allocation2], 32
  %v473 = vld [vmem:[%s472] sm:$0xff]
  %474 = vmatprep.subr.mxu0 0.0
  %475 = vmatpush1.msra.mxu0 %v162
  %476 = vmatprep.subr.mxu0 0.0
  %477 = vmatpush1.msra.mxu0 %v163
  %478 = vmatprep.subr.mxu0 0.0
  %479 = vmatpush1.msra.mxu0 %v164
  %480 = vmatprep.subr.mxu0 0.0
  %481 = vmatpush1.msra.mxu0 %v165
  %482 = vmatprep.subr.mxu0 0.0
  %483 = vmatpush1.msra.mxu0 %v166
  %484 = vmatprep.subr.mxu0 0.0
  %485 = vmatpush1.msra.mxu0 %v167
  %486 = vmatprep.subr.mxu0 0.0
  %487 = vmatpush1.msra.mxu0 %v168
  %488 = vmatprep.subr.mxu0 0.0
  %489 = vmatpush1.msra.mxu0 %v169
  %490 = vmatprep.subr.mxu0 0.0
  %491 = vmatpush1.msra.mxu0 %v170
  %492 = vmatprep.subr.mxu0 0.0
  %493 = vmatpush1.msra.mxu0 %v171
  %494 = vmatprep.subr.mxu0 0.0
  %495 = vmatpush1.msra.mxu0 %v172
  %496 = vmatprep.subr.mxu0 0.0
  %497 = vmatpush1.msra.mxu0 %v173
  %498 = vmatprep.subr.mxu0 0.0
  %499 = vmatpush1.msra.mxu0 %v174
  %500 = vmatprep.subr.mxu0 0.0
  %501 = vmatpush1.msra.mxu0 %v175
  %502 = vmatprep.subr.mxu0 0.0
  %503 = vmatpush1.msra.mxu0 %v176
  %504 = vmatprep.subr.mxu0 0.0
  %505 = vmatpush1.msra.mxu0 %v177
  %506 = vmatprep.subr.mxu0 0.0
  %507 = vmatpush1.msra.mxu0 0.0
  %508 = vmatprep.subr.mxu0 0.0
  %509 = vmatpush1.msra.mxu0 0.0
  %510 = vmatprep.subr.mxu0 0.0
  %511 = vmatpush1.msra.mxu0 0.0
  %512 = vmatprep.subr.mxu0 0.0
  %513 = vmatpush1.msra.mxu0 0.0
  %514 = vmatprep.subr.mxu0 0.0
  %515 = vmatpush1.msra.mxu0 0.0
  %516 = vmatprep.subr.mxu0 0.0
  %517 = vmatpush1.msra.mxu0 0.0
  %518 = vmatprep.subr.mxu0 0.0
  %519 = vmatpush1.msra.mxu0 0.0
  %520 = vmatprep.subr.mxu0 0.0
  %521 = vmatpush1.msra.mxu0 0.0
  %522 = vmatprep.subr.mxu0 0.0
  %523 = vmatpush1.msra.mxu0 0.0
  %524 = vmatprep.subr.mxu0 0.0
  %525 = vmatpush1.msra.mxu0 0.0
  %526 = vmatprep.subr.mxu0 0.0
  %527 = vmatpush1.msra.mxu0 0.0
  %528 = vmatprep.subr.mxu0 0.0
  %529 = vmatpush1.msra.mxu0 0.0
  %530 = vmatprep.subr.mxu0 0.0
  %531 = vmatpush1.msra.mxu0 0.0
  %532 = vmatprep.subr.mxu0 0.0
  %533 = vmatpush1.msra.mxu0 0.0
  %534 = vmatprep.subr.mxu0 0.0
  %535 = vmatpush1.msra.mxu0 0.0
  %536 = vmatprep.subr.mxu0 0.0
  %537 = vmatpush1.msra.mxu0 0.0
  %538 = vmatprep.mubr.f32.mxu0 0.0
  %539 = vmatmul.mubr.f32.gmra.mrb[0].mxu0 %v471
  %v540 = vpop.f32.mrb[0].mxu0
  %v541 = vadd.f32 0.0, %v540
  %v542 = vpop.f32.mrb[0].mxu0
  %543 = vdwg.mxu0
  %v544 = vadd.f32 %v473, %v541
  %v545 = vtanh.pop %v544
  %s546 = scalar_lea.vmem [#allocation2], 40
  %v547 = vld [vmem:[%s546] sm:$0xff]
  %548 = vmatprep.subr.mxu0 0.0
  %549 = vmatpush1.msra.mxu0 %v162
  %550 = vmatprep.subr.mxu0 0.0
  %551 = vmatpush1.msra.mxu0 %v163
  %552 = vmatprep.subr.mxu0 0.0
  %553 = vmatpush1.msra.mxu0 %v164
  %554 = vmatprep.subr.mxu0 0.0
  %555 = vmatpush1.msra.mxu0 %v165
  %556 = vmatprep.subr.mxu0 0.0
  %557 = vmatpush1.msra.mxu0 %v166
  %558 = vmatprep.subr.mxu0 0.0
  %559 = vmatpush1.msra.mxu0 %v167
  %560 = vmatprep.subr.mxu0 0.0
  %561 = vmatpush1.msra.mxu0 %v168
  %562 = vmatprep.subr.mxu0 0.0
  %563 = vmatpush1.msra.mxu0 %v169
  %564 = vmatprep.subr.mxu0 0.0
  %565 = vmatpush1.msra.mxu0 %v170
  %566 = vmatprep.subr.mxu0 0.0
  %567 = vmatpush1.msra.mxu0 %v171
  %568 = vmatprep.subr.mxu0 0.0
  %569 = vmatpush1.msra.mxu0 %v172
  %570 = vmatprep.subr.mxu0 0.0
  %571 = vmatpush1.msra.mxu0 %v173
  %572 = vmatprep.subr.mxu0 0.0
  %573 = vmatpush1.msra.mxu0 %v174
  %574 = vmatprep.subr.mxu0 0.0
  %575 = vmatpush1.msra.mxu0 %v175
  %576 = vmatprep.subr.mxu0 0.0
  %577 = vmatpush1.msra.mxu0 %v176
  %578 = vmatprep.subr.mxu0 0.0
  %579 = vmatpush1.msra.mxu0 %v177
  %580 = vmatprep.subr.mxu0 0.0
  %581 = vmatpush1.msra.mxu0 0.0
  %582 = vmatprep.subr.mxu0 0.0
  %583 = vmatpush1.msra.mxu0 0.0
  %584 = vmatprep.subr.mxu0 0.0
  %585 = vmatpush1.msra.mxu0 0.0
  %586 = vmatprep.subr.mxu0 0.0
  %587 = vmatpush1.msra.mxu0 0.0
  %588 = vmatprep.subr.mxu0 0.0
  %589 = vmatpush1.msra.mxu0 0.0
  %590 = vmatprep.subr.mxu0 0.0
  %591 = vmatpush1.msra.mxu0 0.0
  %592 = vmatprep.subr.mxu0 0.0
  %593 = vmatpush1.msra.mxu0 0.0
  %594 = vmatprep.subr.mxu0 0.0
  %595 = vmatpush1.msra.mxu0 0.0
  %596 = vmatprep.subr.mxu0 0.0
  %597 = vmatpush1.msra.mxu0 0.0
  %598 = vmatprep.subr.mxu0 0.0
  %599 = vmatpush1.msra.mxu0 0.0
  %600 = vmatprep.subr.mxu0 0.0
  %601 = vmatpush1.msra.mxu0 0.0
  %602 = vmatprep.subr.mxu0 0.0
  %603 = vmatpush1.msra.mxu0 0.0
  %604 = vmatprep.subr.mxu0 0.0
  %605 = vmatpush1.msra.mxu0 0.0
  %606 = vmatprep.subr.mxu0 0.0
  %607 = vmatpush1.msra.mxu0 0.0
  %608 = vmatprep.subr.mxu0 0.0
  %609 = vmatpush1.msra.mxu0 0.0
  %610 = vmatprep.subr.mxu0 0.0
  %611 = vmatpush1.msra.mxu0 0.0
  %612 = vmatprep.mubr.f32.mxu0 0.0
  %613 = vmatmul.mubr.f32.gmra.mrb[0].mxu0 %v545
  %v614 = vpop.f32.mrb[0].mxu0
  %v615 = vadd.f32 0.0, %v614
  %v616 = vpop.f32.mrb[0].mxu0
  %617 = vdwg.mxu0
  %v618 = vadd.f32 %v547, %v615
  %v619 = vtanh.pop %v618
  %s620 = scalar_lea.vmem [#allocation2], 48
  %v621 = vld [vmem:[%s620] sm:$0xff]
  %622 = vmatprep.subr.mxu0 0.0
  %623 = vmatpush1.msra.mxu0 %v162
  %624 = vmatprep.subr.mxu0 0.0
  %625 = vmatpush1.msra.mxu0 %v163
  %626 = vmatprep.subr.mxu0 0.0
  %627 = vmatpush1.msra.mxu0 %v164
  %628 = vmatprep.subr.mxu0 0.0
  %629 = vmatpush1.msra.mxu0 %v165
  %630 = vmatprep.subr.mxu0 0.0
  %631 = vmatpush1.msra.mxu0 %v166
  %632 = vmatprep.subr.mxu0 0.0
  %633 = vmatpush1.msra.mxu0 %v167
  %634 = vmatprep.subr.mxu0 0.0
  %635 = vmatpush1.msra.mxu0 %v168
  %636 = vmatprep.subr.mxu0 0.0
  %637 = vmatpush1.msra.mxu0 %v169
  %638 = vmatprep.subr.mxu0 0.0
  %639 = vmatpush1.msra.mxu0 %v170
  %640 = vmatprep.subr.mxu0 0.0
  %641 = vmatpush1.msra.mxu0 %v171
  %642 = vmatprep.subr.mxu0 0.0
  %643 = vmatpush1.msra.mxu0 %v172
  %644 = vmatprep.subr.mxu0 0.0
  %645 = vmatpush1.msra.mxu0 %v173
  %646 = vmatprep.subr.mxu0 0.0
  %647 = vmatpush1.msra.mxu0 %v174
  %648 = vmatprep.subr.mxu0 0.0
  %649 = vmatpush1.msra.mxu0 %v175
  %650 = vmatprep.subr.mxu0 0.0
  %651 = vmatpush1.msra.mxu0 %v176
  %652 = vmatprep.subr.mxu0 0.0
  %653 = vmatpush1.msra.mxu0 %v177
  %654 = vmatprep.subr.mxu0 0.0
  %655 = vmatpush1.msra.mxu0 0.0
  %656 = vmatprep.subr.mxu0 0.0
  %657 = vmatpush1.msra.mxu0 0.0
  %658 = vmatprep.subr.mxu0 0.0
  %659 = vmatpush1.msra.mxu0 0.0
  %660 = vmatprep.subr.mxu0 0.0
  %661 = vmatpush1.msra.mxu0 0.0
  %662 = vmatprep.subr.mxu0 0.0
  %663 = vmatpush1.msra.mxu0 0.0
  %664 = vmatprep.subr.mxu0 0.0
  %665 = vmatpush1.msra.mxu0 0.0
  %666 = vmatprep.subr.mxu0 0.0
  %667 = vmatpush1.msra.mxu0 0.0
  %668 = vmatprep.subr.mxu0 0.0
  %669 = vmatpush1.msra.mxu0 0.0
  %670 = vmatprep.subr.mxu0 0.0
  %671 = vmatpush1.msra.mxu0 0.0
  %672 = vmatprep.subr.mxu0 0.0
  %673 = vmatpush1.msra.mxu0 0.0
  %674 = vmatprep.subr.mxu0 0.0
  %675 = vmatpush1.msra.mxu0 0.0
  %676 = vmatprep.subr.mxu0 0.0
  %677 = vmatpush1.msra.mxu0 0.0
  %678 = vmatprep.subr.mxu0 0.0
  %679 = vmatpush1.msra.mxu0 0.0
  %680 = vmatprep.subr.mxu0 0.0
  %681 = vmatpush1.msra.mxu0 0.0
  %682 = vmatprep.subr.mxu0 0.0
  %683 = vmatpush1.msra.mxu0 0.0
  %684 = vmatprep.subr.mxu0 0.0
  %685 = vmatpush1.msra.mxu0 0.0
  %686 = vmatprep.mubr.f32.mxu0 0.0
  %687 = vmatmul.mubr.f32.gmra.mrb[0].mxu0 %v619
  %v688 = vpop.f32.mrb[0].mxu0
  %v689 = vadd.f32 0.0, %v688
  %v690 = vpop.f32.mrb[0].mxu0
  %691 = vdwg.mxu0
  %v692 = vadd.f32 %v621, %v689
  %v693 = vtanh.pop %v692
  %s694 = scalar_lea.vmem [#allocation2], 56
  %v695 = vld [vmem:[%s694] sm:$0xff]
  %696 = vmatprep.subr.mxu0 0.0
  %697 = vmatpush1.msra.mxu0 %v162
  %698 = vmatprep.subr.mxu0 0.0
  %699 = vmatpush1.msra.mxu0 %v163
  %700 = vmatprep.subr.mxu0 0.0
  %701 = vmatpush1.msra.mxu0 %v164
  %702 = vmatprep.subr.mxu0 0.0
  %703 = vmatpush1.msra.mxu0 %v165
  %704 = vmatprep.subr.mxu0 0.0
  %705 = vmatpush1.msra.mxu0 %v166
  %706 = vmatprep.subr.mxu0 0.0
  %707 = vmatpush1.msra.mxu0 %v167
  %708 = vmatprep.subr.mxu0 0.0
  %709 = vmatpush1.msra.mxu0 %v168
  %710 = vmatprep.subr.mxu0 0.0
  %711 = vmatpush1.msra.mxu0 %v169
  %712 = vmatprep.subr.mxu0 0.0
  %713 = vmatpush1.msra.mxu0 %v170
  %714 = vmatprep.subr.mxu0 0.0
  %715 = vmatpush1.msra.mxu0 %v171
  %716 = vmatprep.subr.mxu0 0.0
  %717 = vmatpush1.msra.mxu0 %v172
  %718 = vmatprep.subr.mxu0 0.0
  %719 = vmatpush1.msra.mxu0 %v173
  %720 = vmatprep.subr.mxu0 0.0
  %721 = vmatpush1.msra.mxu0 %v174
  %722 = vmatprep.subr.mxu0 0.0
  %723 = vmatpush1.msra.mxu0 %v175
  %724 = vmatprep.subr.mxu0 0.0
  %725 = vmatpush1.msra.mxu0 %v176
  %726 = vmatprep.subr.mxu0 0.0
  %727 = vmatpush1.msra.mxu0 %v177
  %728 = vmatprep.subr.mxu0 0.0
  %729 = vmatpush1.msra.mxu0 0.0
  %730 = vmatprep.subr.mxu0 0.0
  %731 = vmatpush1.msra.mxu0 0.0
  %732 = vmatprep.subr.mxu0 0.0
  %733 = vmatpush1.msra.mxu0 0.0
  %734 = vmatprep.subr.mxu0 0.0
  %735 = vmatpush1.msra.mxu0 0.0
  %736 = vmatprep.subr.mxu0 0.0
  %737 = vmatpush1.msra.mxu0 0.0
  %738 = vmatprep.subr.mxu0 0.0
  %739 = vmatpush1.msra.mxu0 0.0
  %740 = vmatprep.subr.mxu0 0.0
  %741 = vmatpush1.msra.mxu0 0.0
  %742 = vmatprep.subr.mxu0 0.0
  %743 = vmatpush1.msra.mxu0 0.0
  %744 = vmatprep.subr.mxu0 0.0
  %745 = vmatpush1.msra.mxu0 0.0
  %746 = vmatprep.subr.mxu0 0.0
  %747 = vmatpush1.msra.mxu0 0.0
  %748 = vmatprep.subr.mxu0 0.0
  %749 = vmatpush1.msra.mxu0 0.0
  %750 = vmatprep.subr.mxu0 0.0
  %751 = vmatpush1.msra.mxu0 0.0
  %752 = vmatprep.subr.mxu0 0.0
  %753 = vmatpush1.msra.mxu0 0.0
  %754 = vmatprep.subr.mxu0 0.0
  %755 = vmatpush1.msra.mxu0 0.0
  %756 = vmatprep.subr.mxu0 0.0
  %757 = vmatpush1.msra.mxu0 0.0
  %758 = vmatprep.subr.mxu0 0.0
  %759 = vmatpush1.msra.mxu0 0.0
  %760 = vmatprep.mubr.f32.mxu0 0.0
  %761 = vmatmul.mubr.f32.gmra.mrb[0].mxu0 %v693
  %v762 = vpop.f32.mrb[0].mxu0
  %v763 = vadd.f32 0.0, %v762
  %v764 = vpop.f32.mrb[0].mxu0
  %765 = vdwg.mxu0
  %v766 = vadd.f32 %v695, %v763
  %v767 = vtanh.pop %v766
  %768 = vst [vmem:[%s4] sm:$0xff] %v767
  // Predicated region
  $region18: #{rnn_forward_pallas.1} parent=0 // pred_check
    _
  $region19: #{rnn_forward_pallas.1} parent=0 // pred_check_branch
    %770 = sbr.rel (0) target = $region21
  $region20: #{rnn_forward_pallas.1} parent=0 // pred_region
    _
  $region21: #{rnn_forward_pallas.1} parent=0 // pred_fallthru
    _
  // Predicated region
  $region22: #{rnn_forward_pallas.1} parent=0 // pred_check
    _
  $region23: #{rnn_forward_pallas.1} parent=0 // pred_check_branch
    %772 = sbr.rel (0) target = $region25
  $region24: #{rnn_forward_pallas.1} parent=0 // pred_region
    _
  $region25: #{rnn_forward_pallas.1} parent=0 // pred_fallthru
    _

</llo_original>
